<compile_context>
chip_gen: v7x
topology: tpu7x:2x2x1
jax: 0.10.0
libtpu: 0.0.40
codegen_flags: <defaults>
</compile_context>

<pallas_src>
import jax
import jax.numpy as jnp
from jax.experimental import pallas as pl
from jax.experimental.pallas import tpu as pltpu


def _cdiv(a, b):
    return -(-a // b)


def _outconv_kernel(x_ref, w_ref, b_ref, o_ref):
    # x_ref: (Cin, T, 128) VMEM    w_ref: (Cout*Cin,) SMEM    b_ref: (Cout,) SMEM
    # o_ref: (Cout, T, 128) VMEM
    cin = x_ref.shape[0]
    cout = o_ref.shape[0]
    for co in range(cout):                      # fully unrolled: Cout*Cin VPU FMAs
        acc = x_ref[0].astype(jnp.float32) * w_ref[co * cin] + b_ref[co]
        for ci in range(1, cin):
            acc = acc + x_ref[ci].astype(jnp.float32) * w_ref[co * cin + ci]
        o_ref[co] = acc.astype(o_ref.dtype)     # full-density, unmasked stores


def out_conv(x_nchw, weight, bias, *, tile_rows=1024):
    """1x1 Conv2d forward (matches nn.Conv2d(Cin, Cout, kernel_size=1)).

    x_nchw: (N, Cin, H, W)
    weight: (Cout, Cin, 1, 1)
    bias:   (Cout,)
    returns (N, Cout, H, W)
    """
    N, Cin, H, W = x_nchw.shape
    Cout = weight.shape[0]
    HW = H * W

    # Pixels on sublanes: HW -> (R, 128) rows of 128 lanes each.
    R = _cdiv(HW, 128)
    HW_pad = R * 128

    # Tile rows: big enough to amortize the ~0.35us per-step overhead,
    # small enough to (a) fit comfortably in v7x's 64 MiB VMEM and
    # (b) leave >= ~8 grid steps so both v7x TensorCores get work and the
    # pipeline has iterations to overlap DMA with compute.
    steps_per_n = max(1, _cdiv(8, N))
    rows_for_steps = _cdiv(R, steps_per_n)
    tr = min(tile_rows, max(8, rows_for_steps), R)
    if tr < R:
        tr = max(8, (tr // 8) * 8)          # multiple of 8 sublanes
    else:
        tr = R                               # full dim (allowed even if < 8)
    grid = (N, _cdiv(R, tr))

    # Explicit VMEM budget from the real per-step footprint (double-buffered).
    itemsize = jnp.dtype(x_nchw.dtype).itemsize
    step_bytes = (Cin + Cout) * tr * 128 * itemsize
    vmem_limit = int(min(max(4 * step_bytes, 16 * 2**20), 48 * 2**20))

    # Free reshapes (no transpose); pad HW to a multiple of 128 if ragged.
    x_flat = x_nchw.reshape(N, Cin, HW)
    if HW_pad != HW:
        x_flat = jnp.pad(x_flat, ((0, 0), (0, 0), (0, HW_pad - HW)))
    x_rows = x_flat.reshape(N, Cin, R, 128)
    w_flat = weight.reshape(Cout * Cin)      # row-major: w_flat[co*Cin + ci]
    b_vec = bias.reshape(Cout)

    out_rows = pl.pallas_call(
        _outconv_kernel,
        out_shape=jax.ShapeDtypeStruct((N, Cout, R, 128), x_nchw.dtype),
        grid_spec=pltpu.PrefetchScalarGridSpec(
            num_scalar_prefetch=0,
            grid=grid,
            in_specs=[
                # batch dim squeezed -> kernel sees (Cin, tr, 128), pixels dense
                pl.BlockSpec((None, Cin, tr, 128), lambda n, j: (n, 0, j, 0)),
                # weights / bias as SMEM scalars (no VMEM residency, no DMA)
                pl.BlockSpec(memory_space=pltpu.MemorySpace.SMEM),
                pl.BlockSpec(memory_space=pltpu.MemorySpace.SMEM),
            ],
            out_specs=pl.BlockSpec((None, Cout, tr, 128),
                                   lambda n, j: (n, 0, j, 0)),
        ),
        compiler_params=pltpu.CompilerParams(
            dimension_semantics=("parallel", "parallel"),
            vmem_limit_bytes=vmem_limit,
        ),
    )(x_rows, w_flat, b_vec)

    out = out_rows.reshape(N, Cout, HW_pad)
    if HW_pad != HW:
        out = out[:, :, :HW]
    return out.reshape(N, Cout, H, W)


if __name__ == "__main__":
    key = jax.random.PRNGKey(0)
    k_x, k_w, k_b = jax.random.split(key, 3)

    # Small shapes consistent with OutConv(in_channels=4, out_channels=3)
    N, Cin, H, W = 2, 4, 16, 16
    Cout = 3

    x = jax.random.normal(k_x, (N, Cin, H, W), dtype=jnp.float32)
    weight = jax.random.normal(k_w, (Cout, Cin, 1, 1), dtype=jnp.float32) * 0.1
    bias = jax.random.normal(k_b, (Cout,), dtype=jnp.float32) * 0.1

    y = jax.block_until_ready(out_conv(x, weight, bias))

    y_ref = (
        jnp.einsum("nchw,oc->nohw", x, weight.reshape(Cout, Cin))
        + bias.reshape(1, Cout, 1, 1)
    )
    assert y.shape == (N, Cout, H, W)
    assert jnp.allclose(y, y_ref, atol=1e-5, rtol=1e-5)

    # Ragged-HW check: HW not a multiple of 128 (exercises the pad + slice
    # path and a tile covering the full, non-multiple-of-8 sublane extent).
    H2 = W2 = 20                                     # HW = 400 -> padded to 512
    x2 = jax.random.normal(k_x, (N, Cin, H2, W2), dtype=jnp.float32)
    y2 = jax.block_until_ready(out_conv(x2, weight, bias))
    y2_ref = (
        jnp.einsum("nchw,oc->nohw", x2, weight.reshape(Cout, Cin))
        + bias.reshape(1, Cout, 1, 1)
    )
    assert jnp.allclose(y2, y2_ref, atol=1e-5, rtol=1e-5)

    print("KERNEL_OK")
</pallas_src>

<mosaic_0001>
module attributes {stable_mosaic.version = 11 : i64} {
  func.func @_outconv_kernel(%arg0: i32, %arg1: i32, %arg2: memref<1x4x2x128xf32, #tpu.memory_space<vmem>>, %arg3: memref<12xf32, #tpu.memory_space<smem>>, %arg4: memref<3xf32, #tpu.memory_space<smem>>, %arg5: memref<1x3x2x128xf32, #tpu.memory_space<vmem>>) attributes {dimension_semantics = [#tpu.dimension_semantics<parallel>, #tpu.dimension_semantics<parallel>], iteration_bounds = array<i64: 2, 1>, scalar_prefetch = 0 : i64, scratch_operands = 0 : i64, tpu.core_type = #tpu.core_type<tc>, window_params = [{transform_indices = @transform_0, window_bounds = array<i64: 1, 4, 2, 128>}, {transform_indices = @transform_1, window_bounds = array<i64: 12>}, {transform_indices = @transform_2, window_bounds = array<i64: 3>}, {transform_indices = @transform_3, window_bounds = array<i64: 1, 3, 2, 128>}]} {
    %c0 = arith.constant 0 : index
    %c0_0 = arith.constant 0 : index
    %c0_1 = arith.constant 0 : index
    %c0_2 = arith.constant 0 : index
    %0 = vector.load %arg2[%c0, %c0_0, %c0_1, %c0_2] : memref<1x4x2x128xf32, #tpu.memory_space<vmem>>, vector<1x1x2x128xf32>
    %1 = vector.shape_cast %0 : vector<1x1x2x128xf32> to vector<2x128xf32>
    %c0_3 = arith.constant 0 : index
    %2 = memref.load %arg3[%c0_3] : memref<12xf32, #tpu.memory_space<smem>>
    %3 = vector.broadcast %2 : f32 to vector<2x128xf32>
    %4 = arith.mulf %1, %3 : vector<2x128xf32>
    %c0_4 = arith.constant 0 : index
    %5 = memref.load %arg4[%c0_4] : memref<3xf32, #tpu.memory_space<smem>>
    %6 = vector.broadcast %5 : f32 to vector<2x128xf32>
    %7 = arith.addf %4, %6 : vector<2x128xf32>
    %c0_5 = arith.constant 0 : index
    %c1 = arith.constant 1 : index
    %c0_6 = arith.constant 0 : index
    %c0_7 = arith.constant 0 : index
    %8 = vector.load %arg2[%c0_5, %c1, %c0_6, %c0_7] : memref<1x4x2x128xf32, #tpu.memory_space<vmem>>, vector<1x1x2x128xf32>
    %9 = vector.shape_cast %8 : vector<1x1x2x128xf32> to vector<2x128xf32>
    %c1_8 = arith.constant 1 : index
    %10 = memref.load %arg3[%c1_8] : memref<12xf32, #tpu.memory_space<smem>>
    %11 = vector.broadcast %10 : f32 to vector<2x128xf32>
    %12 = arith.mulf %9, %11 : vector<2x128xf32>
    %13 = arith.addf %7, %12 : vector<2x128xf32>
    %c0_9 = arith.constant 0 : index
    %c2 = arith.constant 2 : index
    %c0_10 = arith.constant 0 : index
    %c0_11 = arith.constant 0 : index
    %14 = vector.load %arg2[%c0_9, %c2, %c0_10, %c0_11] : memref<1x4x2x128xf32, #tpu.memory_space<vmem>>, vector<1x1x2x128xf32>
    %15 = vector.shape_cast %14 : vector<1x1x2x128xf32> to vector<2x128xf32>
    %c2_12 = arith.constant 2 : index
    %16 = memref.load %arg3[%c2_12] : memref<12xf32, #tpu.memory_space<smem>>
    %17 = vector.broadcast %16 : f32 to vector<2x128xf32>
    %18 = arith.mulf %15, %17 : vector<2x128xf32>
    %19 = arith.addf %13, %18 : vector<2x128xf32>
    %c0_13 = arith.constant 0 : index
    %c3 = arith.constant 3 : index
    %c0_14 = arith.constant 0 : index
    %c0_15 = arith.constant 0 : index
    %20 = vector.load %arg2[%c0_13, %c3, %c0_14, %c0_15] : memref<1x4x2x128xf32, #tpu.memory_space<vmem>>, vector<1x1x2x128xf32>
    %21 = vector.shape_cast %20 : vector<1x1x2x128xf32> to vector<2x128xf32>
    %c3_16 = arith.constant 3 : index
    %22 = memref.load %arg3[%c3_16] : memref<12xf32, #tpu.memory_space<smem>>
    %23 = vector.broadcast %22 : f32 to vector<2x128xf32>
    %24 = arith.mulf %21, %23 : vector<2x128xf32>
    %25 = arith.addf %19, %24 : vector<2x128xf32>
    %c0_17 = arith.constant 0 : index
    %c0_18 = arith.constant 0 : index
    %c0_19 = arith.constant 0 : index
    %c0_20 = arith.constant 0 : index
    %26 = vector.load %arg5[%c0_17, %c0_18, %c0_19, %c0_20] : memref<1x3x2x128xf32, #tpu.memory_space<vmem>>, vector<1x1x2x128xf32>
    %27 = vector.shape_cast %26 : vector<1x1x2x128xf32> to vector<2x128xf32>
    %28 = vector.shape_cast %25 : vector<2x128xf32> to vector<1x1x2x128xf32>
    tpu.vector_store %arg5[%c0_17, %c0_18, %c0_19, %c0_20], %28 {strides = array<i32>} : memref<1x3x2x128xf32, #tpu.memory_space<vmem>>, vector<1x1x2x128xf32>,
    %c0_21 = arith.constant 0 : index
    %c0_22 = arith.constant 0 : index
    %c0_23 = arith.constant 0 : index
    %c0_24 = arith.constant 0 : index
    %29 = vector.load %arg2[%c0_21, %c0_22, %c0_23, %c0_24] : memref<1x4x2x128xf32, #tpu.memory_space<vmem>>, vector<1x1x2x128xf32>
    %30 = vector.shape_cast %29 : vector<1x1x2x128xf32> to vector<2x128xf32>
    %c4 = arith.constant 4 : index
    %31 = memref.load %arg3[%c4] : memref<12xf32, #tpu.memory_space<smem>>
    %32 = vector.broadcast %31 : f32 to vector<2x128xf32>
    %33 = arith.mulf %30, %32 : vector<2x128xf32>
    %c1_25 = arith.constant 1 : index
    %34 = memref.load %arg4[%c1_25] : memref<3xf32, #tpu.memory_space<smem>>
    %35 = vector.broadcast %34 : f32 to vector<2x128xf32>
    %36 = arith.addf %33, %35 : vector<2x128xf32>
    %c0_26 = arith.constant 0 : index
    %c1_27 = arith.constant 1 : index
    %c0_28 = arith.constant 0 : index
    %c0_29 = arith.constant 0 : index
    %37 = vector.load %arg2[%c0_26, %c1_27, %c0_28, %c0_29] : memref<1x4x2x128xf32, #tpu.memory_space<vmem>>, vector<1x1x2x128xf32>
    %38 = vector.shape_cast %37 : vector<1x1x2x128xf32> to vector<2x128xf32>
    %c5 = arith.constant 5 : index
    %39 = memref.load %arg3[%c5] : memref<12xf32, #tpu.memory_space<smem>>
    %40 = vector.broadcast %39 : f32 to vector<2x128xf32>
    %41 = arith.mulf %38, %40 : vector<2x128xf32>
    %42 = arith.addf %36, %41 : vector<2x128xf32>
    %c0_30 = arith.constant 0 : index
    %c2_31 = arith.constant 2 : index
    %c0_32 = arith.constant 0 : index
    %c0_33 = arith.constant 0 : index
    %43 = vector.load %arg2[%c0_30, %c2_31, %c0_32, %c0_33] : memref<1x4x2x128xf32, #tpu.memory_space<vmem>>, vector<1x1x2x128xf32>
    %44 = vector.shape_cast %43 : vector<1x1x2x128xf32> to vector<2x128xf32>
    %c6 = arith.constant 6 : index
    %45 = memref.load %arg3[%c6] : memref<12xf32, #tpu.memory_space<smem>>
    %46 = vector.broadcast %45 : f32 to vector<2x128xf32>
    %47 = arith.mulf %44, %46 : vector<2x128xf32>
    %48 = arith.addf %42, %47 : vector<2x128xf32>
    %c0_34 = arith.constant 0 : index
    %c3_35 = arith.constant 3 : index
    %c0_36 = arith.constant 0 : index
    %c0_37 = arith.constant 0 : index
    %49 = vector.load %arg2[%c0_34, %c3_35, %c0_36, %c0_37] : memref<1x4x2x128xf32, #tpu.memory_space<vmem>>, vector<1x1x2x128xf32>
    %50 = vector.shape_cast %49 : vector<1x1x2x128xf32> to vector<2x128xf32>
    %c7 = arith.constant 7 : index
    %51 = memref.load %arg3[%c7] : memref<12xf32, #tpu.memory_space<smem>>
    %52 = vector.broadcast %51 : f32 to vector<2x128xf32>
    %53 = arith.mulf %50, %52 : vector<2x128xf32>
    %54 = arith.addf %48, %53 : vector<2x128xf32>
    %c0_38 = arith.constant 0 : index
    %c1_39 = arith.constant 1 : index
    %c0_40 = arith.constant 0 : index
    %c0_41 = arith.constant 0 : index
    %55 = vector.load %arg5[%c0_38, %c1_39, %c0_40, %c0_41] : memref<1x3x2x128xf32, #tpu.memory_space<vmem>>, vector<1x1x2x128xf32>
    %56 = vector.shape_cast %55 : vector<1x1x2x128xf32> to vector<2x128xf32>
    %57 = vector.shape_cast %54 : vector<2x128xf32> to vector<1x1x2x128xf32>
    tpu.vector_store %arg5[%c0_38, %c1_39, %c0_40, %c0_41], %57 {strides = array<i32>} : memref<1x3x2x128xf32, #tpu.memory_space<vmem>>, vector<1x1x2x128xf32>,
    %c0_42 = arith.constant 0 : index
    %c0_43 = arith.constant 0 : index
    %c0_44 = arith.constant 0 : index
    %c0_45 = arith.constant 0 : index
    %58 = vector.load %arg2[%c0_42, %c0_43, %c0_44, %c0_45] : memref<1x4x2x128xf32, #tpu.memory_space<vmem>>, vector<1x1x2x128xf32>
    %59 = vector.shape_cast %58 : vector<1x1x2x128xf32> to vector<2x128xf32>
    %c8 = arith.constant 8 : index
    %60 = memref.load %arg3[%c8] : memref<12xf32, #tpu.memory_space<smem>>
    %61 = vector.broadcast %60 : f32 to vector<2x128xf32>
    %62 = arith.mulf %59, %61 : vector<2x128xf32>
    %c2_46 = arith.constant 2 : index
    %63 = memref.load %arg4[%c2_46] : memref<3xf32, #tpu.memory_space<smem>>
    %64 = vector.broadcast %63 : f32 to vector<2x128xf32>
    %65 = arith.addf %62, %64 : vector<2x128xf32>
    %c0_47 = arith.constant 0 : index
    %c1_48 = arith.constant 1 : index
    %c0_49 = arith.constant 0 : index
    %c0_50 = arith.constant 0 : index
    %66 = vector.load %arg2[%c0_47, %c1_48, %c0_49, %c0_50] : memref<1x4x2x128xf32, #tpu.memory_space<vmem>>, vector<1x1x2x128xf32>
    %67 = vector.shape_cast %66 : vector<1x1x2x128xf32> to vector<2x128xf32>
    %c9 = arith.constant 9 : index
    %68 = memref.load %arg3[%c9] : memref<12xf32, #tpu.memory_space<smem>>
    %69 = vector.broadcast %68 : f32 to vector<2x128xf32>
    %70 = arith.mulf %67, %69 : vector<2x128xf32>
    %71 = arith.addf %65, %70 : vector<2x128xf32>
    %c0_51 = arith.constant 0 : index
    %c2_52 = arith.constant 2 : index
    %c0_53 = arith.constant 0 : index
    %c0_54 = arith.constant 0 : index
    %72 = vector.load %arg2[%c0_51, %c2_52, %c0_53, %c0_54] : memref<1x4x2x128xf32, #tpu.memory_space<vmem>>, vector<1x1x2x128xf32>
    %73 = vector.shape_cast %72 : vector<1x1x2x128xf32> to vector<2x128xf32>
    %c10 = arith.constant 10 : index
    %74 = memref.load %arg3[%c10] : memref<12xf32, #tpu.memory_space<smem>>
    %75 = vector.broadcast %74 : f32 to vector<2x128xf32>
    %76 = arith.mulf %73, %75 : vector<2x128xf32>
    %77 = arith.addf %71, %76 : vector<2x128xf32>
    %c0_55 = arith.constant 0 : index
    %c3_56 = arith.constant 3 : index
    %c0_57 = arith.constant 0 : index
    %c0_58 = arith.constant 0 : index
    %78 = vector.load %arg2[%c0_55, %c3_56, %c0_57, %c0_58] : memref<1x4x2x128xf32, #tpu.memory_space<vmem>>, vector<1x1x2x128xf32>
    %79 = vector.shape_cast %78 : vector<1x1x2x128xf32> to vector<2x128xf32>
    %c11 = arith.constant 11 : index
    %80 = memref.load %arg3[%c11] : memref<12xf32, #tpu.memory_space<smem>>
    %81 = vector.broadcast %80 : f32 to vector<2x128xf32>
    %82 = arith.mulf %79, %81 : vector<2x128xf32>
    %83 = arith.addf %77, %82 : vector<2x128xf32>
    %c0_59 = arith.constant 0 : index
    %c2_60 = arith.constant 2 : index
    %c0_61 = arith.constant 0 : index
    %c0_62 = arith.constant 0 : index
    %84 = vector.load %arg5[%c0_59, %c2_60, %c0_61, %c0_62] : memref<1x3x2x128xf32, #tpu.memory_space<vmem>>, vector<1x1x2x128xf32>
    %85 = vector.shape_cast %84 : vector<1x1x2x128xf32> to vector<2x128xf32>
    %86 = vector.shape_cast %83 : vector<2x128xf32> to vector<1x1x2x128xf32>
    tpu.vector_store %arg5[%c0_59, %c2_60, %c0_61, %c0_62], %86 {strides = array<i32>} : memref<1x3x2x128xf32, #tpu.memory_space<vmem>>, vector<1x1x2x128xf32>,
    return
  }
  func.func @transform_0(%arg0: i32, %arg1: i32) -> (i32, i32, i32, i32) {
    %c0_i32 = arith.constant 0 : i32
    %c0_i32_0 = arith.constant 0 : i32
    %c0_i32_1 = arith.constant 0 : i32
    return %arg0, %c0_i32, %arg1, %c0_i32_0 : i32, i32, i32, i32
  }
  func.func @transform_1(%arg0: i32, %arg1: i32) -> i32 {
    %c0_i32 = arith.constant 0 : i32
    %c0_i32_0 = arith.constant 0 : i32
    return %c0_i32 : i32
  }
  func.func @transform_2(%arg0: i32, %arg1: i32) -> i32 {
    %c0_i32 = arith.constant 0 : i32
    %c0_i32_0 = arith.constant 0 : i32
    return %c0_i32 : i32
  }
  func.func @transform_3(%arg0: i32, %arg1: i32) -> (i32, i32, i32, i32) {
    %c0_i32 = arith.constant 0 : i32
    %c0_i32_0 = arith.constant 0 : i32
    %c0_i32_1 = arith.constant 0 : i32
    return %arg0, %c0_i32, %arg1, %c0_i32_0 : i32, i32, i32, i32
  }
}

</mosaic_0001>

<llo_original>
// kernel: tpu_custom_call.1
$region0: #{tpu_custom_call.1}
  #allocation0 [shape = 'u32[]', space=smem, size = 0x4, offset = 0x4, fixed_abs, tag = 'smem constant byte address 0x4 - core index']
  #allocation1 [shape = 'u32[144,128]{1,0:T(1,128)}', space=vmem, size = 0x12000, scoped, tag = 'internal scratch']
  %s0 = inlined_call_operand.hbm [shape: f32[2,4,2,128], index: 0, kind: input, shape index: {}]
  %s1 = inlined_call_operand.vmem [shape: f32[12], index: 1, kind: input, shape index: {}]
  %s2 = inlined_call_operand.vmem [shape: f32[3], index: 2, kind: input, shape index: {}]
  %s3 = inlined_call_operand.hbm [shape: f32[2,3,2,128], index: 3, kind: output, shape index: {}]
  %s4 = sld [smem:[#allocation0]]
  $region57: #{tpu_custom_call.1} parent=0
    _
  %s6 = ssub.s32 1, %s4
  %s7 = scalar_select 0, %s6, %s4
  $region1: #{tpu_custom_call.1} parent=0
    #allocation2 [shape = 'u8[8192]{0}', space=vmem, size = 0x2000, scoped, tag = 'input window, operand 0']
    #allocation3 [shape = 's32[2]{0}', space=sflag, size = 0x8, scoped, tag = 'scoped memory for tpu_custom_call.1']
    #allocation4 [shape = 's32[2]{0}', space=sflag, size = 0x8, scoped, tag = 'scoped memory for tpu_custom_call.1']
    #allocation5 [shape = 's32[2]{0}', space=sflag, size = 0x8, scoped, tag = 'scoped memory for tpu_custom_call.1']
    #allocation6 [shape = 'u8[512]{0}', space=smem, size = 0x200, scoped, tag = 'input window, operand 1, single buffered']
    #allocation7 [shape = 'u8[512]{0}', space=smem, size = 0x200, scoped, tag = 'input window, operand 2, single buffered']
    #allocation8 [shape = 's32[1]{0}', space=sflag, size = 0x4, scoped, tag = 'scoped memory for tpu_custom_call.1']
    #allocation9 [shape = 'u8[6144]{0}', space=vmem, size = 0x1800, scoped, tag = 'output window, operand 0']
    %8 = vsyncpa [#allocation3], 0
    %s9 = scalar_lea.sflag [#allocation3], 1
    %10 = vsyncpa %s9, 0
    %11 = vsyncpa [#allocation5], 0
    %12 = vsyncpa [#allocation8], 0
    %13 = vsyncpa [#allocation4], 0
    %s14 = scalar_lea.sflag [#allocation4], 1
    %15 = vsyncpa %s14, 0
    loop: start=0, step=1, limit=4
    $region2: #{tpu_custom_call.1} parent=1 // loop_pre_header
      _
    $region3: #{tpu_custom_call.1} parent=1 // loop_header
      %s17 = sphi 0, %s21
      %p18 = scmp.ge.s32.totalorder %s17, 4
      %s24 = sphi 0, %s36
      %s25 = sphi 0, %s32
      %s26 = sphi 0, %s24
      %s27 = sphi 0, %s25
      %s28 = sphi 0, %s26
      %s29 = sphi 0, %s27
      %s41 = sphi 0, %s43
      %s44 = sphi 0, %s41
      %s45 = sphi 0, %s44
      %s61 = sphi 0, %s45
      %s65 = sphi 0, %s65
      %s67 = sphi 0, %s65
      %s68 = sphi 0, %s67
      %s82 = sphi 0, %s68
      %s86 = sphi 0, %s86
      %s88 = sphi 0, %s86
      %s89 = sphi 0, %s88
      %s103 = sphi 0, %s89
      %s111 = sphi 0, %s113
      %s114 = sphi 0, %s111
      %s115 = sphi 0, %s114
      %s131 = sphi 0, %s115
    $region4: #{tpu_custom_call.1} parent=1 // loop_header_branch
      %20 = sbr.rel (%p18) target = $region8
    $region5: #{tpu_custom_call.1} parent=1 // loop_body
      %s22 = ssub.s32 %s17, 1
      %s23 = ssub.s32 %s17, 2
      %s30 = sadd.s32 1, %s25
      %p31 = scmp.ge.s32.totalorder %s30, 1
      %s32 = scalar_select %p31, 0, %s30
      %s33 = sadd.s32 1, %s24
      %s34 = scalar_select %p31, %s33, %s24
      %p35 = scmp.ge.s32.totalorder %s34, 2
      %s36 = scalar_select %p35, 0, %s34
      %s37 = ssub.s32 %s24, %s36
      %s38 = ssub.s32 %s25, %s32
      %s39 = sor.u32 %s37, %s38
      %p40 = scmp.eq.s32.totalorder %s39, 0
      %s42 = sadd.s32 %s41, 1
      %s43 = scalar_select %p40, %s41, %s42
      %p46 = pneg %p40
      %p47 = scmp.eq.s32.totalorder %s17, 1
      %p48 = por %p46, %p47
      %p49 = scmp.ne.s32.totalorder %s41, %s44
      %p50 = scmp.eq.s32.totalorder %s17, 0
      %p51 = por %p49, %p50
      %p52 = scmp.ne.s32.totalorder %s41, %s44
      %p53 = scmp.eq.s32.totalorder %s22, 1
      %p54 = por %p52, %p53
      %p55 = scmp.ne.s32.totalorder %s44, %s45
      %p56 = scmp.eq.s32.totalorder %s22, 0
      %p57 = por %p55, %p56
      %p58 = scmp.ne.s32.totalorder %s44, %s45
      %p59 = scmp.eq.s32.totalorder %s23, 1
      %p60 = por %p58, %p59
      %p62 = scmp.ne.s32.totalorder %s45, %s61
      %p63 = scmp.eq.s32.totalorder %s23, 0
      %p64 = por %p62, %p63
      %s66 = sadd.s32 %s65, 1
      %p69 = scmp.eq.s32.totalorder %s17, 1
      %p70 = scmp.ne.s32.totalorder %s65, %s67
      %p71 = scmp.eq.s32.totalorder %s17, 0
      %p72 = por %p70, %p71
      %p73 = scmp.ne.s32.totalorder %s65, %s67
      %p74 = scmp.eq.s32.totalorder %s22, 1
      %p75 = por %p73, %p74
      %p76 = scmp.ne.s32.totalorder %s67, %s68
      %p77 = scmp.eq.s32.totalorder %s22, 0
      %p78 = por %p76, %p77
      %p79 = scmp.ne.s32.totalorder %s67, %s68
      %p80 = scmp.eq.s32.totalorder %s23, 1
      %p81 = por %p79, %p80
      %p83 = scmp.ne.s32.totalorder %s68, %s82
      %p84 = scmp.eq.s32.totalorder %s23, 0
      %p85 = por %p83, %p84
      %s87 = sadd.s32 %s86, 1
      %p90 = scmp.eq.s32.totalorder %s17, 1
      %p91 = scmp.ne.s32.totalorder %s86, %s88
      %p92 = scmp.eq.s32.totalorder %s17, 0
      %p93 = por %p91, %p92
      %p94 = scmp.ne.s32.totalorder %s86, %s88
      %p95 = scmp.eq.s32.totalorder %s22, 1
      %p96 = por %p94, %p95
      %p97 = scmp.ne.s32.totalorder %s88, %s89
      %p98 = scmp.eq.s32.totalorder %s22, 0
      %p99 = por %p97, %p98
      %p100 = scmp.ne.s32.totalorder %s88, %s89
      %p101 = scmp.eq.s32.totalorder %s23, 1
      %p102 = por %p100, %p101
      %p104 = scmp.ne.s32.totalorder %s89, %s103
      %p105 = scmp.eq.s32.totalorder %s23, 0
      %p106 = por %p104, %p105
      %s107 = ssub.s32 %s24, %s36
      %s108 = ssub.s32 %s25, %s32
      %s109 = sor.u32 %s107, %s108
      %p110 = scmp.eq.s32.totalorder %s109, 0
      %s112 = sadd.s32 %s111, 1
      %s113 = scalar_select %p110, %s111, %s112
      %p116 = pneg %p110
      %p117 = scmp.eq.s32.totalorder %s17, 1
      %p118 = por %p116, %p117
      %p119 = scmp.ne.s32.totalorder %s111, %s114
      %p120 = scmp.eq.s32.totalorder %s17, 0
      %p121 = por %p119, %p120
      %p122 = scmp.ne.s32.totalorder %s111, %s114
      %p123 = scmp.eq.s32.totalorder %s22, 1
      %p124 = por %p122, %p123
      %p125 = scmp.ne.s32.totalorder %s114, %s115
      %p126 = scmp.eq.s32.totalorder %s22, 0
      %p127 = por %p125, %p126
      %p128 = scmp.ne.s32.totalorder %s114, %s115
      %p129 = scmp.eq.s32.totalorder %s23, 1
      %p130 = por %p128, %p129
      %p132 = scmp.ne.s32.totalorder %s115, %s131
      %p133 = scmp.eq.s32.totalorder %s23, 0
      %p134 = por %p132, %p133
      %p135 = scmp.le.s32.totalorder 1, %s17
      %p136 = scmp.lt.s32.totalorder %s17, 3
      %p137 = pnand %p135, %p136
      %p138 = pneg %p137
      // Predicated region
      $region9: #{tpu_custom_call.1} parent=5 // pred_check
        _
      $region10: #{tpu_custom_call.1} parent=5 // pred_check_branch
        %140 = sbr.rel (%p137) target = $region12
      $region11: #{tpu_custom_call.1} parent=5 // pred_region
        %s141 = ssub.s32 %s17, 1
        // Predicated region
        $region13: #{tpu_custom_call.1} parent=11 // pred_check
          %p142 = pneg %p78
        $region14: #{tpu_custom_call.1} parent=11 // pred_check_branch
          %144 = sbr.rel (%p142) target = $region16
        $region15: #{tpu_custom_call.1} parent=11 // pred_region
          %s146 = ssub.s32 16, 16
          %147 = vsyncadd [#allocation5], %s146
          %s149 = sshll.u32 %s1, 4
          %s150 = int_to_ptr.vmem [resolvable:$true] %s149
          %152 = dma.vmem_to_smem %s150, 16, [#allocation6], [#allocation5]
        $region16: #{tpu_custom_call.1} parent=11 // pred_fallthru
          _
        // Predicated region
        $region17: #{tpu_custom_call.1} parent=11 // pred_check
          %p153 = pneg %p99
        $region18: #{tpu_custom_call.1} parent=11 // pred_check_branch
          %155 = sbr.rel (%p153) target = $region20
        $region19: #{tpu_custom_call.1} parent=11 // pred_region
          %s157 = ssub.s32 16, 16
          %158 = vsyncadd [#allocation8], %s157
          %s160 = sshll.u32 %s2, 4
          %s161 = int_to_ptr.vmem [resolvable:$true] %s160
          %163 = dma.vmem_to_smem %s161, 16, [#allocation7], [#allocation8]
        $region20: #{tpu_custom_call.1} parent=11 // pred_fallthru
          _
      $region12: #{tpu_custom_call.1} parent=5 // pred_fallthru
        _
      %p164 = scmp.lt.s32.totalorder %s17, 2
      // Predicated region
      $region21: #{tpu_custom_call.1} parent=5 // pred_check
        %p165 = pneg %p164
      $region22: #{tpu_custom_call.1} parent=5 // pred_check_branch
        %167 = sbr.rel (%p165) target = $region24
      $region23: #{tpu_custom_call.1} parent=5 // pred_region
        // Predicated region
        $region25: #{tpu_custom_call.1} parent=23 // pred_check
          %p168 = pneg %p51
        $region26: #{tpu_custom_call.1} parent=23 // pred_check_branch
          %170 = sbr.rel (%p168) target = $region28
        $region27: #{tpu_custom_call.1} parent=23 // pred_region
          %s171 = sand.u32 %s41, 1
          %s172 = scalar_lea.sflag [#allocation3], %s171
          %s173 = sand.u32 %s41, 1
          %s174 = smul.addr %s173, 8
          %s175 = scalar_lea.vmem [#allocation2], %s174
          %s177 = ssub.s32 128, 128
          %178 = vsyncadd %s172, %s177
          %s179 = smul.addr %s24, 4
          %s180 = sadd.s32 %s25, %s179
          %s181 = smul.addr %s180, 32
          %s182 = scalar_lea.hbm %s0, %s181
          %s183 = sshll.u32 %s175, 4
          %s184 = int_to_ptr.vmem [resolvable:$true] %s183
          %189 = dma.hbm_to_vmem [thread:$0]  %s182, 128, %s184, %s172, 32, 32, 2
        $region28: #{tpu_custom_call.1} parent=23 // pred_fallthru
          _
      $region24: #{tpu_custom_call.1} parent=5 // pred_fallthru
        _
      %p190 = scmp.le.s32.totalorder 1, %s17
      %p191 = scmp.lt.s32.totalorder %s17, 3
      %p192 = pnand %p190, %p191
      %p193 = pneg %p192
      // Predicated region
      $region29: #{tpu_custom_call.1} parent=5 // pred_check
        _
      $region30: #{tpu_custom_call.1} parent=5 // pred_check_branch
        %195 = sbr.rel (%p192) target = $region32
      $region31: #{tpu_custom_call.1} parent=5 // pred_region
        %s196 = ssub.s32 %s17, 1
        %s197 = sand.u32 %s44, 1
        %s198 = scalar_lea.sflag [#allocation3], %s197
        %s199 = sand.u32 %s44, 1
        %s200 = smul.addr %s199, 8
        %s201 = scalar_lea.vmem [#allocation2], %s200
        // Predicated region
        $region33: #{tpu_custom_call.1} parent=31 // pred_check
          %p202 = pneg %p57
        $region34: #{tpu_custom_call.1} parent=31 // pred_check_branch
          %204 = sbr.rel (%p202) target = $region36
        $region35: #{tpu_custom_call.1} parent=31 // pred_region
          %205 = dma.done %s198, 128
        $region36: #{tpu_custom_call.1} parent=31 // pred_fallthru
          _
        // Predicated region
        $region37: #{tpu_custom_call.1} parent=31 // pred_check
          %p206 = pneg %p78
        $region38: #{tpu_custom_call.1} parent=31 // pred_check_branch
          %208 = sbr.rel (%p206) target = $region40
        $region39: #{tpu_custom_call.1} parent=31 // pred_region
          %209 = dma.done [#allocation5], 16
        $region40: #{tpu_custom_call.1} parent=31 // pred_fallthru
          _
        // Predicated region
        $region41: #{tpu_custom_call.1} parent=31 // pred_check
          %p210 = pneg %p99
        $region42: #{tpu_custom_call.1} parent=31 // pred_check_branch
          %212 = sbr.rel (%p210) target = $region44
        $region43: #{tpu_custom_call.1} parent=31 // pred_region
          %213 = dma.done [#allocation8], 16
        $region44: #{tpu_custom_call.1} parent=31 // pred_fallthru
          _
        %214 = sfence
        %s215 = sand.u32 %s44, 1
        %s216 = scalar_lea.sflag [#allocation3], %s215
        %s217 = sand.u32 %s44, 1
        %s218 = smul.addr %s217, 8
        %s219 = scalar_lea.vmem [#allocation2], %s218
        %p220 = pneg %p57
        %p221 = pneg %p54
        %p222 = pneg %p78
        %p223 = pneg %p75
        %p224 = pneg %p99
        %p225 = pneg %p96
        %p226 = pneg %p127
        %p227 = pneg %p124
        %s228 = sand.u32 %s114, 1
        %s229 = scalar_lea.sflag [#allocation4], %s228
        %s230 = sand.u32 %s114, 1
        %s231 = smul.addr %s230, 6
        %s232 = scalar_lea.vmem [#allocation9], %s231
        %v233 = vld [vmem:[%s201] sm:$0x3]
        %s234 = sld [smem:[#allocation6]]
        %v235 = vstv %s234
        %v236 = vmul.f32 %v233, %v235
        %s237 = sld [smem:[#allocation7]]
        %v238 = vstv %s237
        %v239 = vadd.f32 %v236, %v238
        %s240 = scalar_lea.vmem %s201, 2 [#allocation2]
        %v241 = vld [vmem:[%s240] sm:$0x3]
        %s242 = sld [smem:[#allocation6 + $0x1]]
        %v243 = vstv %s242
        %v244 = vmul.f32 %v241, %v243
        %v245 = vadd.f32 %v239, %v244
        %s246 = scalar_lea.vmem %s201, 4 [#allocation2]
        %v247 = vld [vmem:[%s246] sm:$0x3]
        %s248 = sld [smem:[#allocation6 + $0x2]]
        %v249 = vstv %s248
        %v250 = vmul.f32 %v247, %v249
        %v251 = vadd.f32 %v245, %v250
        %s252 = scalar_lea.vmem %s201, 6 [#allocation2]
        %v253 = vld [vmem:[%s252] sm:$0x3]
        %s254 = sld [smem:[#allocation6 + $0x3]]
        %v255 = vstv %s254
        %v256 = vmul.f32 %v253, %v255
        %v257 = vadd.f32 %v251, %v256
        %258 = vst [vmem:[%s232] sm:$0x3] %v257
        %v259 = vld [vmem:[%s201] sm:$0x3]
        %s260 = sld [smem:[#allocation6 + $0x4]]
        %v261 = vstv %s260
        %v262 = vmul.f32 %v259, %v261
        %s263 = sld [smem:[#allocation7 + $0x1]]
        %v264 = vstv %s263
        %v265 = vadd.f32 %v262, %v264
        %v266 = vld [vmem:[%s240] sm:$0x3]
        %s267 = sld [smem:[#allocation6 + $0x5]]
        %v268 = vstv %s267
        %v269 = vmul.f32 %v266, %v268
        %v270 = vadd.f32 %v265, %v269
        %v271 = vld [vmem:[%s246] sm:$0x3]
        %s272 = sld [smem:[#allocation6 + $0x6]]
        %v273 = vstv %s272
        %v274 = vmul.f32 %v271, %v273
        %v275 = vadd.f32 %v270, %v274
        %v276 = vld [vmem:[%s252] sm:$0x3]
        %s277 = sld [smem:[#allocation6 + $0x7]]
        %v278 = vstv %s277
        %v279 = vmul.f32 %v276, %v278
        %v280 = vadd.f32 %v275, %v279
        %s281 = scalar_lea.vmem %s232, 2 [#allocation9]
        %282 = vst [vmem:[%s281] sm:$0x3] %v280
        %v283 = vld [vmem:[%s201] sm:$0x3]
        %s284 = sld [smem:[#allocation6 + $0x8]]
        %v285 = vstv %s284
        %v286 = vmul.f32 %v283, %v285
        %s287 = sld [smem:[#allocation7 + $0x2]]
        %v288 = vstv %s287
        %v289 = vadd.f32 %v286, %v288
        %v290 = vld [vmem:[%s240] sm:$0x3]
        %s291 = sld [smem:[#allocation6 + $0x9]]
        %v292 = vstv %s291
        %v293 = vmul.f32 %v290, %v292
        %v294 = vadd.f32 %v289, %v293
        %v295 = vld [vmem:[%s246] sm:$0x3]
        %s296 = sld [smem:[#allocation6 + $0xa]]
        %v297 = vstv %s296
        %v298 = vmul.f32 %v295, %v297
        %v299 = vadd.f32 %v294, %v298
        %v300 = vld [vmem:[%s252] sm:$0x3]
        %s301 = sld [smem:[#allocation6 + $0xb]]
        %v302 = vstv %s301
        %v303 = vmul.f32 %v300, %v302
        %v304 = vadd.f32 %v299, %v303
        %s305 = scalar_lea.vmem %s232, 4 [#allocation9]
        %306 = vst [vmem:[%s305] sm:$0x3] %v304
        %s307 = sand.u32 %s114, 1
        %s308 = scalar_lea.sflag [#allocation4], %s307
        %s309 = sand.u32 %s114, 1
        %s310 = smul.addr %s309, 6
        %s311 = scalar_lea.vmem [#allocation9], %s310
        // Predicated region
        $region45: #{tpu_custom_call.1} parent=31 // pred_check
          %p312 = pneg %p124
        $region46: #{tpu_custom_call.1} parent=31 // pred_check_branch
          %314 = sbr.rel (%p312) target = $region48
        $region47: #{tpu_custom_call.1} parent=31 // pred_region
          %s316 = ssub.s32 96, 96
          %317 = vsyncadd %s308, %s316
          %s318 = smul.addr %s26, 3
          %s319 = sadd.s32 %s27, %s318
          %s320 = smul.addr %s319, 32
          %s321 = scalar_lea.hbm %s3, %s320
          %s322 = sshll.u32 %s311, 4
          %s323 = int_to_ptr.vmem [resolvable:$true] %s322
          %328 = dma.vmem_to_hbm [thread:$0]  %s323, 96, %s321, %s308, 32, 32, 2
        $region48: #{tpu_custom_call.1} parent=31 // pred_fallthru
          _
      $region32: #{tpu_custom_call.1} parent=5 // pred_fallthru
        _
      %p329 = scmp.le.s32.totalorder 2, %s17
      // Predicated region
      $region49: #{tpu_custom_call.1} parent=5 // pred_check
        %p330 = pneg %p329
      $region50: #{tpu_custom_call.1} parent=5 // pred_check_branch
        %332 = sbr.rel (%p330) target = $region52
      $region51: #{tpu_custom_call.1} parent=5 // pred_region
        %s333 = ssub.s32 %s17, 2
        // Predicated region
        $region53: #{tpu_custom_call.1} parent=51 // pred_check
          %p334 = pneg %p130
        $region54: #{tpu_custom_call.1} parent=51 // pred_check_branch
          %336 = sbr.rel (%p334) target = $region56
        $region55: #{tpu_custom_call.1} parent=51 // pred_region
          %s337 = sand.u32 %s115, 1
          %s338 = scalar_lea.sflag [#allocation4], %s337
          %s339 = sand.u32 %s115, 1
          %s340 = smul.addr %s339, 6
          %s341 = scalar_lea.vmem [#allocation9], %s340
          %342 = dma.done %s338, 96
        $region56: #{tpu_custom_call.1} parent=51 // pred_fallthru
          _
      $region52: #{tpu_custom_call.1} parent=5 // pred_fallthru
        _
    $region6: #{tpu_custom_call.1} parent=1 // loop_footer
      %s21 = sadd.s32 1, %s17
    $region7: #{tpu_custom_call.1} parent=1 // loop_footer_branch
      %16 = sbr.rel target = $region3
    $region8: #{tpu_custom_call.1} parent=1 // loop_exit
      _
    %343 = vsyncpa [#allocation3], 1
    %s344 = scalar_lea.sflag [#allocation3], 1
    %345 = vsyncpa %s344, 1
    %346 = vsyncpa [#allocation4], 1
    %s347 = scalar_lea.sflag [#allocation4], 1
    %348 = vsyncpa %s347, 1
    %349 = vsyncpa [#allocation5], 1
    %s350 = scalar_lea.sflag [#allocation5], 1
    %351 = vsyncpa %s350, 1
    %352 = vsyncpa [#allocation8], 1

</llo_original>
